<compile_context>
chip_gen: v7x
topology: tpu7x:2x2x1
jax: 0.10.0
libtpu: 0.0.40
codegen_flags: <defaults>
</compile_context>

<pallas_src>
import jax
import jax.numpy as jnp
from jax.experimental import pallas as pl
from jax.experimental.pallas import tpu as pltpu

IN_FEATURES = 10
OUT_FEATURES = 4
IN_PAD = 16            # sublane-padded input rows: 10 features + 1 ones-row + pad
ONES_ROW = IN_FEATURES  # row 10 of x_t holds the constant 1.0 (bias generator)
HID_PAD = 128          # padded hidden width (requires dim1 <= 127; one row reserved)
OUT_PAD = 8            # sublane-padded output rows (4 real outputs)
LANE = 128


def _mlp_kernel(xt_ref, w1t_ref, w23t_ref, ot_ref):
    # Fully feature-major (transposed) compute: batch is on the lane axis.
    xt = xt_ref[...]            # (IN_PAD, TB): rows 0..9 features, row 10 = 1.0
    w1t = w1t_ref[...]          # (HID_PAD, IN_PAD): W1^T, b1 folded into col 10,
                                #   ones-generator row at index dim1
    w23t = w23t_ref[...]        # (OUT_PAD, HID_PAD): (W2@W3)^T, fused bias in col dim1

    h1 = jnp.dot(w1t, xt, preferred_element_type=jnp.float32)     # (HID_PAD, TB)
    h1 = jnp.maximum(h1, 0.0)                                     # ReLU (ones row stays 1)
    out = jnp.dot(w23t, h1, preferred_element_type=jnp.float32)   # (OUT_PAD, TB)
    ot_ref[...] = out.astype(ot_ref.dtype)                        # lane-dense store


def _round_up(x, m):
    return (x + m - 1) // m * m


def _pack_weights(params):
    """Fuse linear2+linear3 and fold biases into transposed matmul operands."""
    w1, b1, w2, b2, w3, b3 = params
    dim1 = w1.shape[1]
    assert dim1 <= HID_PAD - 1, "packed weights assume dim1 <= 127"
    w23 = w2 @ w3                    # (dim1, 4)
    b23 = b2 @ w3 + b3               # (1, 4)

    w1t = jnp.zeros((HID_PAD, IN_PAD), jnp.float32)
    w1t = w1t.at[:dim1, :IN_FEATURES].set(w1.T)
    w1t = w1t.at[:dim1, ONES_ROW].set(b1[0])       # b1 via the ones-row of x_t
    w1t = w1t.at[dim1, ONES_ROW].set(1.0)           # generates the ones-row of h1

    w23t = jnp.zeros((OUT_PAD, HID_PAD), jnp.float32)
    w23t = w23t.at[:OUT_FEATURES, :dim1].set(w23.T)
    w23t = w23t.at[:OUT_FEATURES, dim1].set(b23[0])  # fused bias via h1 ones-row
    return w1t, w23t


def mymodel_forward(x, params, *, tb=8192):
    """Fused forward pass of MyModel on TPU via Pallas (gridded over batch)."""
    B = x.shape[0]
    w1t, w23t = _pack_weights(params)
    # TODO(synk): if the producer supplies x feature-major ((IN_PAD, B) with the
    # ones-row) and the consumer accepts the (OUT_PAD, B) padded output, the
    # wrapper transpose/slice below disappear entirely.

    # Batch tile on the lane axis: multiple of 128, capped by padded batch.
    tb_eff = max(LANE, min(_round_up(tb, LANE), _round_up(B, LANE)))
    # Prefer >= 2 grid steps when batch allows (uses both TensorCores on v7x).
    if _round_up(B, LANE) <= tb_eff and B > LANE:
        tb_eff = max(LANE, _round_up(B, 2 * LANE) // 2)
    B_pad = _round_up(B, tb_eff)

    # Feature-major input with the bias ones-row; padded batch columns stay 0,
    # so padded outputs are exactly 0 (no separate jnp.pad pass over x).
    xt = jnp.zeros((IN_PAD, B_pad), jnp.float32)
    xt = xt.at[:IN_FEATURES, :B].set(x.T)
    xt = xt.at[ONES_ROW, :B].set(1.0)

    out_t = pl.pallas_call(
        _mlp_kernel,
        out_shape=jax.ShapeDtypeStruct((OUT_PAD, B_pad), jnp.float32),
        grid=(B_pad // tb_eff,),
        in_specs=[
            pl.BlockSpec((IN_PAD, tb_eff), lambda i: (0, i)),
            # constant index_maps -> weights stay resident in VMEM
            pl.BlockSpec((HID_PAD, IN_PAD), lambda i: (0, 0)),
            pl.BlockSpec((OUT_PAD, HID_PAD), lambda i: (0, 0)),
        ],
        out_specs=pl.BlockSpec((OUT_PAD, tb_eff), lambda i: (0, i)),
        compiler_params=pltpu.CompilerParams(
            dimension_semantics=("parallel",)),
    )(xt, w1t, w23t)

    return out_t[:OUT_FEATURES, :B].T


def init_params(key, dim1, dim2, in_features=IN_FEATURES, out_features=OUT_FEATURES):
    """Deterministic init mirroring nn.Linear shapes (stored as (in, out))."""
    ks = jax.random.split(key, 6)

    def lin(kw, kb, fan_in, fan_out):
        bound = 1.0 / jnp.sqrt(fan_in)
        w = jax.random.uniform(kw, (fan_in, fan_out), jnp.float32, -bound, bound)
        b = jax.random.uniform(kb, (1, fan_out), jnp.float32, -bound, bound)
        return w, b

    w1, b1 = lin(ks[0], ks[1], in_features, dim1)
    w2, b2 = lin(ks[2], ks[3], dim1, dim2)
    w3, b3 = lin(ks[4], ks[5], dim2, out_features)
    return (w1, b1, w2, b2, w3, b3)


def _reference(x, params):
    w1, b1, w2, b2, w3, b3 = params
    h = jnp.maximum(x @ w1 + b1, 0.0)
    h = h @ w2 + b2
    return h @ w3 + b3


if __name__ == "__main__":
    key = jax.random.PRNGKey(0)
    kx, kx2, kp = jax.random.split(key, 3)

    dim1, dim2 = 32, 16
    params = init_params(kp, dim1, dim2)

    # Small case (single grid step).
    batch = 8
    x = jax.random.normal(kx, (batch, IN_FEATURES), dtype=jnp.float32)
    out = jax.block_until_ready(mymodel_forward(x, params))
    ref = _reference(x, params)
    assert out.shape == (batch, OUT_FEATURES)
    assert jnp.allclose(out, ref, atol=1e-4, rtol=1e-4)

    # Larger, non-multiple batch (exercises multi-step grid + padding path).
    batch2 = 300
    x2 = jax.random.normal(kx2, (batch2, IN_FEATURES), dtype=jnp.float32)
    out2 = jax.block_until_ready(mymodel_forward(x2, params, tb=128))
    ref2 = _reference(x2, params)
    assert out2.shape == (batch2, OUT_FEATURES)
    assert jnp.allclose(out2, ref2, atol=1e-4, rtol=1e-4)

    # Default (large-tile) path on the non-multiple batch as well.
    out3 = jax.block_until_ready(mymodel_forward(x2, params))
    assert jnp.allclose(out3, ref2, atol=1e-4, rtol=1e-4)

    print("KERNEL_OK")
</pallas_src>

<mosaic_0001>
module attributes {stable_mosaic.version = 11 : i64} {
  func.func @_mlp_kernel(%arg0: i32, %arg1: memref<16x128xf32, #tpu.memory_space<vmem>>, %arg2: memref<128x16xf32, #tpu.memory_space<vmem>>, %arg3: memref<8x128xf32, #tpu.memory_space<vmem>>, %arg4: memref<8x128xf32, #tpu.memory_space<vmem>>) attributes {dimension_semantics = [#tpu.dimension_semantics<parallel>], iteration_bounds = array<i64: 1>, scalar_prefetch = 0 : i64, scratch_operands = 0 : i64, tpu.core_type = #tpu.core_type<tc>, window_params = [{transform_indices = @transform_0, window_bounds = array<i64: 16, 128>}, {pipeline_mode = #tpu.pipeline_mode<synchronous>, transform_indices = @transform_1, window_bounds = array<i64: 128, 16>}, {pipeline_mode = #tpu.pipeline_mode<synchronous>, transform_indices = @transform_2, window_bounds = array<i64: 8, 128>}, {transform_indices = @transform_3, window_bounds = array<i64: 8, 128>}]} {
    %c0 = arith.constant 0 : index
    %c0_0 = arith.constant 0 : index
    %0 = vector.load %arg1[%c0, %c0_0] : memref<16x128xf32, #tpu.memory_space<vmem>>, vector<16x128xf32>
    %c0_1 = arith.constant 0 : index
    %c0_2 = arith.constant 0 : index
    %1 = vector.load %arg2[%c0_1, %c0_2] : memref<128x16xf32, #tpu.memory_space<vmem>>, vector<128x16xf32>
    %c0_3 = arith.constant 0 : index
    %c0_4 = arith.constant 0 : index
    %2 = vector.load %arg3[%c0_3, %c0_4] : memref<8x128xf32, #tpu.memory_space<vmem>>, vector<8x128xf32>
    %cst = arith.constant dense<0.000000e+00> : vector<128x128xf32>
    %3 = tpu.matmul %1, %0, %cst {dimension_numbers = #tpu.dot_dimension_numbers<[1], [0], [0], [1], [0, 0, 1, 1], [], []>} : vector<128x16xf32>, vector<16x128xf32>, vector<128x128xf32> -> vector<128x128xf32>
    %cst_5 = arith.constant 0.000000e+00 : f32
    %4 = vector.broadcast %cst_5 : f32 to vector<128x128xf32>
    %5 = arith.maximumf %3, %4 : vector<128x128xf32>
    %cst_6 = arith.constant dense<0.000000e+00> : vector<8x128xf32>
    %6 = tpu.matmul %2, %5, %cst_6 {dimension_numbers = #tpu.dot_dimension_numbers<[1], [0], [0], [1], [0, 0, 1, 1], [], []>} : vector<8x128xf32>, vector<128x128xf32>, vector<8x128xf32> -> vector<8x128xf32>
    %c0_7 = arith.constant 0 : index
    %c0_8 = arith.constant 0 : index
    %7 = vector.load %arg4[%c0_7, %c0_8] : memref<8x128xf32, #tpu.memory_space<vmem>>, vector<8x128xf32>
    tpu.vector_store %arg4[%c0_7, %c0_8], %6 {strides = array<i32>} : memref<8x128xf32, #tpu.memory_space<vmem>>, vector<8x128xf32>,
    return
  }
  func.func @transform_0(%arg0: i32) -> (i32, i32) {
    %c0_i32 = arith.constant 0 : i32
    %c0_i32_0 = arith.constant 0 : i32
    return %c0_i32, %arg0 : i32, i32
  }
  func.func @transform_1(%arg0: i32) -> (i32, i32) {
    %c0_i32 = arith.constant 0 : i32
    %c0_i32_0 = arith.constant 0 : i32
    %c0_i32_1 = arith.constant 0 : i32
    return %c0_i32, %c0_i32_0 : i32, i32
  }
  func.func @transform_2(%arg0: i32) -> (i32, i32) {
    %c0_i32 = arith.constant 0 : i32
    %c0_i32_0 = arith.constant 0 : i32
    %c0_i32_1 = arith.constant 0 : i32
    return %c0_i32, %c0_i32_0 : i32, i32
  }
  func.func @transform_3(%arg0: i32) -> (i32, i32) {
    %c0_i32 = arith.constant 0 : i32
    %c0_i32_0 = arith.constant 0 : i32
    return %c0_i32, %arg0 : i32, i32
  }
}

</mosaic_0001>

<llo_original>
// kernel: tpu_custom_call.1
$region0: #{tpu_custom_call.1}
  #allocation0 [shape = 'u32[]', space=smem, size = 0x4, offset = 0x4, fixed_abs, tag = 'smem constant byte address 0x4 - core index']
  #allocation1 [shape = 'u32[144,128]{1,0:T(1,128)}', space=vmem, size = 0x12000, scoped, tag = 'internal scratch']
  %s0 = inlined_call_operand.vmem [shape: f32[16,128], index: 0, kind: input, shape index: {}]
  %s1 = inlined_call_operand.vmem [shape: f32[128,16], index: 1, kind: input, shape index: {}]
  %s2 = inlined_call_operand.vmem [shape: f32[8,128], index: 2, kind: input, shape index: {}]
  %s3 = inlined_call_operand.hbm [shape: f32[8,128], index: 3, kind: output, shape index: {}]
  %s4 = sld [smem:[#allocation0]]
  $region22: #{tpu_custom_call.1} parent=0
    _
  %s6 = ssub.s32 1, %s4
  %s7 = scalar_select 0, %s6, %s4
  $region1: #{tpu_custom_call.1} parent=0
    #allocation2 [shape = 'u8[4096]{0}', space=vmem, size = 0x1000, scoped, tag = 'output window, operand 0, single buffered']
    #allocation3 [shape = 's32[1]{0}', space=sflag, size = 0x4, scoped, tag = 'scoped memory for tpu_custom_call.1']
    %8 = vsyncpa [#allocation3], 0
    // Predicated region
    $region2: #{tpu_custom_call.1} parent=1 // pred_check
      _
    $region3: #{tpu_custom_call.1} parent=1 // pred_check_branch
      %10 = sbr.rel (0) target = $region5
    $region4: #{tpu_custom_call.1} parent=1 // pred_region
      _
    $region5: #{tpu_custom_call.1} parent=1 // pred_fallthru
      _
    // Predicated region
    $region6: #{tpu_custom_call.1} parent=1 // pred_check
      _
    $region7: #{tpu_custom_call.1} parent=1 // pred_check_branch
      %12 = sbr.rel (0) target = $region9
    $region8: #{tpu_custom_call.1} parent=1 // pred_region
      _
    $region9: #{tpu_custom_call.1} parent=1 // pred_fallthru
      _
    // Predicated region
    $region10: #{tpu_custom_call.1} parent=1 // pred_check
      _
    $region11: #{tpu_custom_call.1} parent=1 // pred_check_branch
      %14 = sbr.rel (0) target = $region13
    $region12: #{tpu_custom_call.1} parent=1 // pred_region
      _
    $region13: #{tpu_custom_call.1} parent=1 // pred_fallthru
      _
    %v15 = vld [vmem:[%s0] sm:$0xff]
    %v16 = vld [vmem:[%s0 + $0x8] sm:$0xff]
    %v17 = vld [vmem:[%s1] sm:$0xff]
    %v18 = vld [vmem:[%s1 + $0x8] sm:$0xff]
    %v19 = vld [vmem:[%s1 + $0x10] sm:$0xff]
    %v20 = vld [vmem:[%s1 + $0x18] sm:$0xff]
    %v21 = vld [vmem:[%s1 + $0x20] sm:$0xff]
    %v22 = vld [vmem:[%s1 + $0x28] sm:$0xff]
    %v23 = vld [vmem:[%s1 + $0x30] sm:$0xff]
    %v24 = vld [vmem:[%s1 + $0x38] sm:$0xff]
    %v25 = vld [vmem:[%s1 + $0x40] sm:$0xff]
    %v26 = vld [vmem:[%s1 + $0x48] sm:$0xff]
    %v27 = vld [vmem:[%s1 + $0x50] sm:$0xff]
    %v28 = vld [vmem:[%s1 + $0x58] sm:$0xff]
    %v29 = vld [vmem:[%s1 + $0x60] sm:$0xff]
    %v30 = vld [vmem:[%s1 + $0x68] sm:$0xff]
    %v31 = vld [vmem:[%s1 + $0x70] sm:$0xff]
    %v32 = vld [vmem:[%s1 + $0x78] sm:$0xff]
    %v33 = vld [vmem:[%s2] sm:$0xff]
    %vm34 = vcmask 130048
    %v36 = vsel %vm34, %v17, 0
    %v39 = vsel %vm34, %v18, 0
    %v42 = vsel %vm34, %v19, 0
    %v45 = vsel %vm34, %v20, 0
    %v48 = vsel %vm34, %v21, 0
    %v51 = vsel %vm34, %v22, 0
    %v54 = vsel %vm34, %v23, 0
    %v57 = vsel %vm34, %v24, 0
    %v60 = vsel %vm34, %v25, 0
    %v63 = vsel %vm34, %v26, 0
    %v66 = vsel %vm34, %v27, 0
    %v69 = vsel %vm34, %v28, 0
    %v72 = vsel %vm34, %v29, 0
    %v75 = vsel %vm34, %v30, 0
    %v78 = vsel %vm34, %v31, 0
    %v81 = vsel %vm34, %v32, 0
    %83 = vmatprep.subr.mxu0 0.0
    %84 = vmatpush1.msra.mxu0 %v15
    %85 = vmatprep.subr.mxu0 0.0
    %86 = vmatpush1.msra.mxu0 %v16
    %87 = vmatprep.subr.mxu0 0.0
    %88 = vmatpush1.msra.mxu0 0.0
    %89 = vmatprep.subr.mxu0 0.0
    %90 = vmatpush1.msra.mxu0 0.0
    %91 = vmatprep.subr.mxu0 0.0
    %92 = vmatpush1.msra.mxu0 0.0
    %93 = vmatprep.subr.mxu0 0.0
    %94 = vmatpush1.msra.mxu0 0.0
    %95 = vmatprep.subr.mxu0 0.0
    %96 = vmatpush1.msra.mxu0 0.0
    %97 = vmatprep.subr.mxu0 0.0
    %98 = vmatpush1.msra.mxu0 0.0
    %99 = vmatprep.subr.mxu0 0.0
    %100 = vmatpush1.msra.mxu0 0.0
    %101 = vmatprep.subr.mxu0 0.0
    %102 = vmatpush1.msra.mxu0 0.0
    %103 = vmatprep.subr.mxu0 0.0
    %104 = vmatpush1.msra.mxu0 0.0
    %105 = vmatprep.subr.mxu0 0.0
    %106 = vmatpush1.msra.mxu0 0.0
    %107 = vmatprep.subr.mxu0 0.0
    %108 = vmatpush1.msra.mxu0 0.0
    %109 = vmatprep.subr.mxu0 0.0
    %110 = vmatpush1.msra.mxu0 0.0
    %111 = vmatprep.subr.mxu0 0.0
    %112 = vmatpush1.msra.mxu0 0.0
    %113 = vmatprep.subr.mxu0 0.0
    %114 = vmatpush1.msra.mxu0 0.0
    %115 = vmatprep.subr.mxu0 0.0
    %116 = vmatpush1.msra.mxu0 0.0
    %117 = vmatprep.subr.mxu0 0.0
    %118 = vmatpush1.msra.mxu0 0.0
    %119 = vmatprep.subr.mxu0 0.0
    %120 = vmatpush1.msra.mxu0 0.0
    %121 = vmatprep.subr.mxu0 0.0
    %122 = vmatpush1.msra.mxu0 0.0
    %123 = vmatprep.subr.mxu0 0.0
    %124 = vmatpush1.msra.mxu0 0.0
    %125 = vmatprep.subr.mxu0 0.0
    %126 = vmatpush1.msra.mxu0 0.0
    %127 = vmatprep.subr.mxu0 0.0
    %128 = vmatpush1.msra.mxu0 0.0
    %129 = vmatprep.subr.mxu0 0.0
    %130 = vmatpush1.msra.mxu0 0.0
    %131 = vmatprep.subr.mxu0 0.0
    %132 = vmatpush1.msra.mxu0 0.0
    %133 = vmatprep.subr.mxu0 0.0
    %134 = vmatpush1.msra.mxu0 0.0
    %135 = vmatprep.subr.mxu0 0.0
    %136 = vmatpush1.msra.mxu0 0.0
    %137 = vmatprep.subr.mxu0 0.0
    %138 = vmatpush1.msra.mxu0 0.0
    %139 = vmatprep.subr.mxu0 0.0
    %140 = vmatpush1.msra.mxu0 0.0
    %141 = vmatprep.subr.mxu0 0.0
    %142 = vmatpush1.msra.mxu0 0.0
    %143 = vmatprep.subr.mxu0 0.0
    %144 = vmatpush1.msra.mxu0 0.0
    %145 = vmatprep.subr.mxu0 0.0
    %146 = vmatpush1.msra.mxu0 0.0
    %147 = vmatprep.mubr.f32.mxu0 0.0
    %148 = vmatmul.mubr.f32.gmra.mrb[0].mxu0 %v36
    %v149 = vpop.f32.mrb[0].mxu0
    %v150 = vadd.f32 0.0, %v149
    %v151 = vpop.f32.mrb[0].mxu0
    %152 = vmatprep.mubr.f32.mxu0 0.0
    %153 = vmatmul.mubr.f32.gmra.mrb[0].mxu0 %v39
    %v154 = vpop.f32.mrb[0].mxu0
    %v155 = vadd.f32 0.0, %v154
    %v156 = vpop.f32.mrb[0].mxu0
    %157 = vmatprep.mubr.f32.mxu0 0.0
    %158 = vmatmul.mubr.f32.gmra.mrb[0].mxu0 %v42
    %v159 = vpop.f32.mrb[0].mxu0
    %v160 = vadd.f32 0.0, %v159
    %v161 = vpop.f32.mrb[0].mxu0
    %162 = vmatprep.mubr.f32.mxu0 0.0
    %163 = vmatmul.mubr.f32.gmra.mrb[0].mxu0 %v45
    %v164 = vpop.f32.mrb[0].mxu0
    %v165 = vadd.f32 0.0, %v164
    %v166 = vpop.f32.mrb[0].mxu0
    %167 = vmatprep.mubr.f32.mxu0 0.0
    %168 = vmatmul.mubr.f32.gmra.mrb[0].mxu0 %v48
    %v169 = vpop.f32.mrb[0].mxu0
    %v170 = vadd.f32 0.0, %v169
    %v171 = vpop.f32.mrb[0].mxu0
    %172 = vmatprep.mubr.f32.mxu0 0.0
    %173 = vmatmul.mubr.f32.gmra.mrb[0].mxu0 %v51
    %v174 = vpop.f32.mrb[0].mxu0
    %v175 = vadd.f32 0.0, %v174
    %v176 = vpop.f32.mrb[0].mxu0
    %177 = vmatprep.mubr.f32.mxu0 0.0
    %178 = vmatmul.mubr.f32.gmra.mrb[0].mxu0 %v54
    %v179 = vpop.f32.mrb[0].mxu0
    %v180 = vadd.f32 0.0, %v179
    %v181 = vpop.f32.mrb[0].mxu0
    %182 = vmatprep.mubr.f32.mxu0 0.0
    %183 = vmatmul.mubr.f32.gmra.mrb[0].mxu0 %v57
    %v184 = vpop.f32.mrb[0].mxu0
    %v185 = vadd.f32 0.0, %v184
    %v186 = vpop.f32.mrb[0].mxu0
    %187 = vmatprep.mubr.f32.mxu0 0.0
    %188 = vmatmul.mubr.f32.gmra.mrb[0].mxu0 %v60
    %v189 = vpop.f32.mrb[0].mxu0
    %v190 = vadd.f32 0.0, %v189
    %v191 = vpop.f32.mrb[0].mxu0
    %192 = vmatprep.mubr.f32.mxu0 0.0
    %193 = vmatmul.mubr.f32.gmra.mrb[0].mxu0 %v63
    %v194 = vpop.f32.mrb[0].mxu0
    %v195 = vadd.f32 0.0, %v194
    %v196 = vpop.f32.mrb[0].mxu0
    %197 = vmatprep.mubr.f32.mxu0 0.0
    %198 = vmatmul.mubr.f32.gmra.mrb[0].mxu0 %v66
    %v199 = vpop.f32.mrb[0].mxu0
    %v200 = vadd.f32 0.0, %v199
    %v201 = vpop.f32.mrb[0].mxu0
    %202 = vmatprep.mubr.f32.mxu0 0.0
    %203 = vmatmul.mubr.f32.gmra.mrb[0].mxu0 %v69
    %v204 = vpop.f32.mrb[0].mxu0
    %v205 = vadd.f32 0.0, %v204
    %v206 = vpop.f32.mrb[0].mxu0
    %207 = vmatprep.mubr.f32.mxu0 0.0
    %208 = vmatmul.mubr.f32.gmra.mrb[0].mxu0 %v72
    %v209 = vpop.f32.mrb[0].mxu0
    %v210 = vadd.f32 0.0, %v209
    %v211 = vpop.f32.mrb[0].mxu0
    %212 = vmatprep.mubr.f32.mxu0 0.0
    %213 = vmatmul.mubr.f32.gmra.mrb[0].mxu0 %v75
    %v214 = vpop.f32.mrb[0].mxu0
    %v215 = vadd.f32 0.0, %v214
    %v216 = vpop.f32.mrb[0].mxu0
    %217 = vmatprep.mubr.f32.mxu0 0.0
    %218 = vmatmul.mubr.f32.gmra.mrb[0].mxu0 %v78
    %v219 = vpop.f32.mrb[0].mxu0
    %v220 = vadd.f32 0.0, %v219
    %v221 = vpop.f32.mrb[0].mxu0
    %222 = vmatprep.mubr.f32.mxu0 0.0
    %223 = vmatmul.mubr.f32.gmra.mrb[0].mxu0 %v81
    %v224 = vpop.f32.mrb[0].mxu0
    %v225 = vadd.f32 0.0, %v224
    %v226 = vpop.f32.mrb[0].mxu0
    %227 = vdwg.mxu0
    %v228 = vmax.f32 %v150, 0.0
    %v229 = vmax.f32 %v155, 0.0
    %v230 = vmax.f32 %v160, 0.0
    %v231 = vmax.f32 %v165, 0.0
    %v232 = vmax.f32 %v170, 0.0
    %v233 = vmax.f32 %v175, 0.0
    %v234 = vmax.f32 %v180, 0.0
    %v235 = vmax.f32 %v185, 0.0
    %v236 = vmax.f32 %v190, 0.0
    %v237 = vmax.f32 %v195, 0.0
    %v238 = vmax.f32 %v200, 0.0
    %v239 = vmax.f32 %v205, 0.0
    %v240 = vmax.f32 %v210, 0.0
    %v241 = vmax.f32 %v215, 0.0
    %v242 = vmax.f32 %v220, 0.0
    %v243 = vmax.f32 %v225, 0.0
    %244 = vmatprep.subr.mxu0 0.0
    %245 = vmatpush1.msra.mxu0 %v228
    %246 = vmatprep.subr.mxu0 0.0
    %247 = vmatpush1.msra.mxu0 %v229
    %248 = vmatprep.subr.mxu0 0.0
    %249 = vmatpush1.msra.mxu0 %v230
    %250 = vmatprep.subr.mxu0 0.0
    %251 = vmatpush1.msra.mxu0 %v231
    %252 = vmatprep.subr.mxu0 0.0
    %253 = vmatpush1.msra.mxu0 %v232
    %254 = vmatprep.subr.mxu0 0.0
    %255 = vmatpush1.msra.mxu0 %v233
    %256 = vmatprep.subr.mxu0 0.0
    %257 = vmatpush1.msra.mxu0 %v234
    %258 = vmatprep.subr.mxu0 0.0
    %259 = vmatpush1.msra.mxu0 %v235
    %260 = vmatprep.subr.mxu0 0.0
    %261 = vmatpush1.msra.mxu0 %v236
    %262 = vmatprep.subr.mxu0 0.0
    %263 = vmatpush1.msra.mxu0 %v237
    %264 = vmatprep.subr.mxu0 0.0
    %265 = vmatpush1.msra.mxu0 %v238
    %266 = vmatprep.subr.mxu0 0.0
    %267 = vmatpush1.msra.mxu0 %v239
    %268 = vmatprep.subr.mxu0 0.0
    %269 = vmatpush1.msra.mxu0 %v240
    %270 = vmatprep.subr.mxu0 0.0
    %271 = vmatpush1.msra.mxu0 %v241
    %272 = vmatprep.subr.mxu0 0.0
    %273 = vmatpush1.msra.mxu0 %v242
    %274 = vmatprep.subr.mxu0 0.0
    %275 = vmatpush1.msra.mxu0 %v243
    %276 = vmatprep.subr.mxu0 0.0
    %277 = vmatpush1.msra.mxu0 0.0
    %278 = vmatprep.subr.mxu0 0.0
    %279 = vmatpush1.msra.mxu0 0.0
    %280 = vmatprep.subr.mxu0 0.0
    %281 = vmatpush1.msra.mxu0 0.0
    %282 = vmatprep.subr.mxu0 0.0
    %283 = vmatpush1.msra.mxu0 0.0
    %284 = vmatprep.subr.mxu0 0.0
    %285 = vmatpush1.msra.mxu0 0.0
    %286 = vmatprep.subr.mxu0 0.0
    %287 = vmatpush1.msra.mxu0 0.0
    %288 = vmatprep.subr.mxu0 0.0
    %289 = vmatpush1.msra.mxu0 0.0
    %290 = vmatprep.subr.mxu0 0.0
    %291 = vmatpush1.msra.mxu0 0.0
    %292 = vmatprep.subr.mxu0 0.0
    %293 = vmatpush1.msra.mxu0 0.0
    %294 = vmatprep.subr.mxu0 0.0
    %295 = vmatpush1.msra.mxu0 0.0
    %296 = vmatprep.subr.mxu0 0.0
    %297 = vmatpush1.msra.mxu0 0.0
    %298 = vmatprep.subr.mxu0 0.0
    %299 = vmatpush1.msra.mxu0 0.0
    %300 = vmatprep.subr.mxu0 0.0
    %301 = vmatpush1.msra.mxu0 0.0
    %302 = vmatprep.subr.mxu0 0.0
    %303 = vmatpush1.msra.mxu0 0.0
    %304 = vmatprep.subr.mxu0 0.0
    %305 = vmatpush1.msra.mxu0 0.0
    %306 = vmatprep.subr.mxu0 0.0
    %307 = vmatpush1.msra.mxu0 0.0
    %308 = vmatprep.mubr.f32.mxu0 0.0
    %309 = vmatmul.mubr.f32.gmra.mrb[0].mxu0 %v33
    %v310 = vpop.f32.mrb[0].mxu0
    %v311 = vadd.f32 0.0, %v310
    %v312 = vpop.f32.mrb[0].mxu0
    %313 = vdwg.mxu0
    %314 = vst [vmem:[#allocation2] sm:$0xff] %v311
    // Predicated region
    $region14: #{tpu_custom_call.1} parent=1 // pred_check
      _
    $region15: #{tpu_custom_call.1} parent=1 // pred_check_branch
      %316 = sbr.rel (0) target = $region17
    $region16: #{tpu_custom_call.1} parent=1 // pred_region
      %s318 = ssub.s32 128, 128
      %319 = vsyncadd [#allocation3], %s318
      %s321 = sshll.u32 [#allocation2], 4
      %s322 = int_to_ptr.vmem [resolvable:$true] %s321
      %324 = dma.vmem_to_hbm [thread:$0]  %s322, 128, %s3, [#allocation3]
    $region17: #{tpu_custom_call.1} parent=1 // pred_fallthru
      _
    // Predicated region
    $region18: #{tpu_custom_call.1} parent=1 // pred_check
      _
    $region19: #{tpu_custom_call.1} parent=1 // pred_check_branch
      %326 = sbr.rel (0) target = $region21
    $region20: #{tpu_custom_call.1} parent=1 // pred_region
      %327 = dma.done [#allocation3], 128
    $region21: #{tpu_custom_call.1} parent=1 // pred_fallthru
      _
    %328 = vsyncpa [#allocation3], 1

</llo_original>
